<compile_context>
chip_gen: v7x
topology: tpu7x:2x2x1
jax: 0.10.0
libtpu: 0.0.40
codegen_flags: <defaults>
</compile_context>

<pallas_src>
import jax
import jax.numpy as jnp
from jax.experimental import pallas as pl
from jax.experimental.pallas import tpu as pltpu


# ---------------------------------------------------------------------------
# Small helpers (trace-time Python only)
# ---------------------------------------------------------------------------
def _round_up(x, m):
    return ((x + m - 1) // m) * m


def _largest_aligned_divisor(dim, target, align):
    """Largest divisor of `dim` that is a multiple of `align` and <= target.

    `dim` must itself be a multiple of `align` (we pad to guarantee this), so
    `align` is always a valid fallback.
    """
    target = max(target, align)
    best = align
    for cand in range(align, min(dim, target) + 1, align):
        if dim % cand == 0:
            best = cand
    return best


def _vmem_limit_bytes():
    """Per-generation scoped-VMEM budget: ~half of physical VMEM."""
    cap = None
    try:
        cap = getattr(pltpu.get_tpu_info(), "vmem_capacity_bytes", None)
    except Exception:
        cap = None
    if not cap:
        cap = 64 * 1024 * 1024          # conservative fallback (v7x-safe)
    # ~64 MiB on v5e/v6e (128 MiB physical), ~32 MiB on v7x (64 MiB physical).
    return int(min(100 * 1024 * 1024, max(32 * 1024 * 1024, cap // 2)))


# ---------------------------------------------------------------------------
# Path 1: single output head (n_outputs == 1) -- tiled VPU reduce, no MXU.
# ---------------------------------------------------------------------------
def _vpu_head_kernel(x_ref, w_ref, b_ref, o_ref, acc_ref):
    # x_ref: (tb, tf) VMEM, w_ref: (1, tf) VMEM, b_ref: (1,) SMEM scalar,
    # o_ref: (tb, 1) VMEM, acc_ref: (tb, 1) f32 scratch. Grid = (B/tb, F/tf).
    f = pl.program_id(1)

    @pl.when(f == 0)
    def _init():
        acc_ref[...] = jnp.zeros_like(acc_ref)

    # VPU broadcast multiply + XLU row reduce; accumulate partial sums over F.
    acc_ref[...] += jnp.sum(x_ref[...] * w_ref[...], axis=-1, keepdims=True)

    @pl.when(f == pl.num_programs(1) - 1)
    def _finalize():
        o_ref[...] = (acc_ref[...] + b_ref[0]).astype(o_ref.dtype)


def _forward_single_head(x, weight, bias, *, tb_target=512, tf_target=2048):
    out_dtype = x.dtype
    B, F = x.shape

    # Zero-pad to (8, 128) alignment (no-op when already aligned; zeros in the
    # padded F columns contribute nothing to the reduction).
    Bp, Fp = _round_up(B, 8), _round_up(F, 128)
    xp = jnp.pad(x, ((0, Bp - B), (0, Fp - F)))
    wp = jnp.pad(weight, ((0, 0), (0, Fp - F)))

    tb = _largest_aligned_divisor(Bp, tb_target, 8)
    tf = _largest_aligned_divisor(Fp, tf_target, 128)
    grid = (Bp // tb, Fp // tf)

    out = pl.pallas_call(
        _vpu_head_kernel,
        out_shape=jax.ShapeDtypeStruct((Bp, 1), out_dtype),
        grid_spec=pltpu.PrefetchScalarGridSpec(
            num_scalar_prefetch=0,
            grid=grid,
            in_specs=[
                pl.BlockSpec((tb, tf), lambda b, f: (b, f)),          # x tile
                pl.BlockSpec((1, tf), lambda b, f: (0, f)),           # w tile
                pl.BlockSpec(memory_space=pltpu.MemorySpace.SMEM),    # bias (1,)
            ],
            out_specs=pl.BlockSpec((tb, 1), lambda b, f: (b, 0)),
            scratch_shapes=[pltpu.VMEM((tb, 1), jnp.float32)],
        ),
        compiler_params=pltpu.CompilerParams(
            dimension_semantics=("parallel", "arbitrary"),
            vmem_limit_bytes=_vmem_limit_bytes(),
        ),
    )(xp, wp, bias)
    return out[:B]


# ---------------------------------------------------------------------------
# Path 2: general tiled MXU matmul (weight pre-transposed to (F, N), bf16 feed)
# ---------------------------------------------------------------------------
def _tiled_linear_kernel_f32(x_ref, wt_ref, b_ref, o_ref):
    # f32 output: accumulate directly into the resident output block.
    # x_ref: (tm, tk), wt_ref: (tk, tn), b_ref: (1, tn) f32, o_ref: (tm, tn) f32
    k = pl.program_id(2)

    @pl.when(k == 0)
    def _init():
        # Seed the accumulator with the bias -> no finalize add needed.
        o_ref[...] = jnp.broadcast_to(b_ref[...], o_ref.shape)

    o_ref[...] += jnp.dot(x_ref[...], wt_ref[...],
                          preferred_element_type=jnp.float32)


def _tiled_linear_kernel_scratch(x_ref, wt_ref, b_ref, o_ref, acc_ref):
    # Non-f32 output: keep an f32 VMEM accumulator, cast at the last K step.
    k = pl.program_id(2)

    @pl.when(k == 0)
    def _init():
        acc_ref[...] = jnp.broadcast_to(b_ref[...], acc_ref.shape)

    acc_ref[...] += jnp.dot(x_ref[...], wt_ref[...],
                            preferred_element_type=jnp.float32)

    @pl.when(k == pl.num_programs(2) - 1)
    def _finalize():
        o_ref[...] = acc_ref[...].astype(o_ref.dtype)


def _select_tiles(Bp, Fp, Np, itemsize, vmem_budget,
                  tm_target, tn_target, tk_target):
    tm = _largest_aligned_divisor(Bp, tm_target, 8)
    # Typical estimator shapes have N << B: keep the whole head dim resident
    # (W loaded once, x streamed a single pass) when N is modest.
    tn = Np if Np <= 512 else _largest_aligned_divisor(Np, tn_target, 128)
    tk = _largest_aligned_divisor(Fp, tk_target, 128)

    # v7x shards the "parallel" grid axes over 2 TensorCores: keep >=2 blocks
    # along M when there is enough work instead of collapsing to one block.
    if Bp // tm == 1 and Np // tn == 1 and Bp >= 128:
        tm = _largest_aligned_divisor(Bp, max(8, Bp // 2), 8)

    def footprint(tm_, tn_, tk_):
        # double-buffered inputs + resident f32 accumulator / output tile
        return 2 * (tm_ * tk_ + tk_ * tn_) * itemsize + 2 * tm_ * tn_ * 4

    budget = vmem_budget // 2          # leave headroom for compiler scratch
    while footprint(tm, tn, tk) > budget and tk > 128:
        tk = _largest_aligned_divisor(Fp, tk // 2, 128)
    while footprint(tm, tn, tk) > budget and tn > 128:
        tn = _largest_aligned_divisor(Np, tn // 2, 128)
    while footprint(tm, tn, tk) > budget and tm > 8:
        tm = _largest_aligned_divisor(Bp, tm // 2, 8)
    return tm, tn, tk


def _forward_tiled(x, weight, bias, *, tm_target=256, tn_target=256,
                   tk_target=512, use_bf16=True):
    out_dtype = x.dtype
    B, F = x.shape
    N = weight.shape[0]

    # Pad to (8, 128) alignment; zero padding on F is exact for the matmul and
    # padded M/N rows/cols are sliced off at the end.  No-op when aligned.
    Bp, Fp, Np = _round_up(B, 8), _round_up(F, 128), _round_up(N, 128)

    # Feed the MXU bf16 (native throughput, half the HBM traffic); keep f32
    # accumulation inside the kernel.  One-time glue: in a real model the
    # transposed / bf16 weight would simply be the stored parameter.
    compute_dtype = jnp.bfloat16 if (use_bf16 and x.dtype == jnp.float32) else x.dtype
    xp = jnp.pad(x, ((0, Bp - B), (0, Fp - F))).astype(compute_dtype)
    wT = jnp.pad(weight.T, ((0, Fp - F), (0, Np - N))).astype(compute_dtype)
    b2 = jnp.pad(bias, (0, Np - N)).astype(jnp.float32).reshape(1, Np)

    vlim = _vmem_limit_bytes()
    tm, tn, tk = _select_tiles(Bp, Fp, Np, jnp.dtype(compute_dtype).itemsize,
                               vlim, tm_target, tn_target, tk_target)
    grid = (Bp // tm, Np // tn, Fp // tk)

    in_specs = [
        pl.BlockSpec((tm, tk), lambda i, j, k: (i, k)),   # x tile
        pl.BlockSpec((tk, tn), lambda i, j, k: (k, j)),   # W^T tile (lane-dense N)
        pl.BlockSpec((1, tn), lambda i, j, k: (0, j)),    # bias tile
    ]
    out_spec = pl.BlockSpec((tm, tn), lambda i, j, k: (i, j))

    if out_dtype == jnp.float32:
        kernel = _tiled_linear_kernel_f32
        scratch_shapes = []
    else:
        kernel = _tiled_linear_kernel_scratch
        scratch_shapes = [pltpu.VMEM((tm, tn), jnp.float32)]

    out = pl.pallas_call(
        kernel,
        out_shape=jax.ShapeDtypeStruct((Bp, Np), out_dtype),
        grid_spec=pltpu.PrefetchScalarGridSpec(
            num_scalar_prefetch=0,
            grid=grid,
            in_specs=in_specs,
            out_specs=out_spec,
            scratch_shapes=scratch_shapes,
        ),
        compiler_params=pltpu.CompilerParams(
            dimension_semantics=("parallel", "parallel", "arbitrary"),
            vmem_limit_bytes=vlim,
        ),
    )(xp, wT, b2)
    return out[:B, :N]


# ---------------------------------------------------------------------------
# Public forward: q_values = x @ weight.T + bias  (PyTorch nn.Linear semantics)
# ---------------------------------------------------------------------------
def estimator_forward(x, weight, bias):
    """x: (B, F), weight: (N, F) f32 (PyTorch layout), bias: (N,) f32."""
    B, F = x.shape
    N, F2 = weight.shape
    assert F == F2 and bias.shape == (N,)

    if N == 1:
        # Module default: tiled VPU broadcast-mul + XLU reduce (never a 1-wide
        # MXU matmul), works for any B / F via the (B, F) grid.
        return _forward_single_head(x, weight, bias)
    return _forward_tiled(x, weight, bias)


def init_estimator_params(key, input_features, n_outputs=1):
    """weight: xavier_normal_; bias: PyTorch Linear default uniform init."""
    k_w, k_b = jax.random.split(key)
    std = (2.0 / (input_features + n_outputs)) ** 0.5
    weight = std * jax.random.normal(k_w, (n_outputs, input_features),
                                     dtype=jnp.float32)
    bound = 1.0 / (input_features ** 0.5)
    bias = jax.random.uniform(k_b, (n_outputs,), dtype=jnp.float32,
                              minval=-bound, maxval=bound)
    return weight, bias


if __name__ == "__main__":
    key = jax.random.PRNGKey(0)
    k_x, k_p, k_x2, k_p2 = jax.random.split(key, 4)

    # --- Small config matching the module default (n_outputs=1): VPU path ---
    B, input_features, n_outputs = 8, 32, 1
    x = jax.random.normal(k_x, (B, input_features), dtype=jnp.float32)
    weight, bias = init_estimator_params(k_p, input_features, n_outputs)

    q_values = jax.block_until_ready(estimator_forward(x, weight, bias))
    ref = jnp.dot(x, weight.T, precision=jax.lax.Precision.HIGHEST) + bias
    assert q_values.shape == (B, n_outputs)
    assert jnp.allclose(q_values, ref, atol=1e-5, rtol=1e-5), "small-path mismatch"

    # --- Larger config exercising the tiled bf16 MXU path ---
    B2, F2, N2 = 256, 512, 256
    x2 = jax.random.normal(k_x2, (B2, F2), dtype=jnp.float32)
    w2, b2 = init_estimator_params(k_p2, F2, N2)

    q2 = jax.block_until_ready(estimator_forward(x2, w2, b2))
    ref2 = jnp.dot(x2, w2.T, precision=jax.lax.Precision.HIGHEST) + b2
    assert q2.shape == (B2, N2)
    assert jnp.allclose(q2, ref2, rtol=2e-2, atol=2e-2), "tiled-path mismatch"

    print("KERNEL_OK")
</pallas_src>

<mosaic_0001>
module attributes {stable_mosaic.version = 11 : i64} {
  func.func @_vpu_head_kernel(%arg0: i32, %arg1: i32, %arg2: memref<8x128xf32, #tpu.memory_space<vmem>>, %arg3: memref<1x128xf32, #tpu.memory_space<vmem>>, %arg4: memref<1xf32, #tpu.memory_space<smem>>, %arg5: memref<8x1xf32, #tpu.memory_space<vmem>>, %arg6: memref<8x1xf32, #tpu.memory_space<vmem>>) attributes {dimension_semantics = [#tpu.dimension_semantics<parallel>, #tpu.dimension_semantics<arbitrary>], iteration_bounds = array<i64: 1, 1>, scalar_prefetch = 0 : i64, scratch_operands = 1 : i64, tpu.core_type = #tpu.core_type<tc>, window_params = [{transform_indices = @transform_0, window_bounds = array<i64: 8, 128>}, {transform_indices = @transform_1, window_bounds = array<i64: 1, 128>}, {transform_indices = @transform_2, window_bounds = array<i64: 1>}, {transform_indices = @transform_3, window_bounds = array<i64: 8, 1>}]} {
    %c0_i32 = arith.constant 0 : i32
    %0 = arith.cmpi eq, %arg1, %c0_i32 : i32
    %1 = arith.extui %0 : i1 to i32
    %c0_i32_0 = arith.constant 0 : i32
    %2 = arith.cmpi ne, %1, %c0_i32_0 : i32
    scf.if %2 {
      %cst_10 = arith.constant 0.000000e+00 : f32
      %15 = vector.broadcast %cst_10 : f32 to vector<8x1xf32>
      %c0_11 = arith.constant 0 : index
      %c0_12 = arith.constant 0 : index
      %16 = vector.load %arg6[%c0_11, %c0_12] : memref<8x1xf32, #tpu.memory_space<vmem>>, vector<8x1xf32>
      tpu.vector_store %arg6[%c0_11, %c0_12], %15 {strides = array<i32>} : memref<8x1xf32, #tpu.memory_space<vmem>>, vector<8x1xf32>,
    } else {
    }
    %c0 = arith.constant 0 : index
    %c0_1 = arith.constant 0 : index
    %3 = vector.load %arg6[%c0, %c0_1] : memref<8x1xf32, #tpu.memory_space<vmem>>, vector<8x1xf32>
    %c0_2 = arith.constant 0 : index
    %c0_3 = arith.constant 0 : index
    %4 = vector.load %arg2[%c0_2, %c0_3] : memref<8x128xf32, #tpu.memory_space<vmem>>, vector<8x128xf32>
    %c0_4 = arith.constant 0 : index
    %c0_5 = arith.constant 0 : index
    %5 = vector.load %arg3[%c0_4, %c0_5] : memref<1x128xf32, #tpu.memory_space<vmem>>, vector<1x128xf32>
    %6 = vector.broadcast %5 : vector<1x128xf32> to vector<8x128xf32>
    %7 = arith.mulf %4, %6 : vector<8x128xf32>
    %cst = arith.constant dense<0.000000e+00> : vector<8xf32>
    %8 = vector.multi_reduction <add>, %7, %cst [1] : vector<8x128xf32> to vector<8xf32>
    %9 = vector.shape_cast %8 : vector<8xf32> to vector<8x1xf32>
    %10 = arith.addf %3, %9 : vector<8x1xf32>
    %c0_6 = arith.constant 0 : index
    %c0_7 = arith.constant 0 : index
    %11 = vector.load %arg6[%c0_6, %c0_7] : memref<8x1xf32, #tpu.memory_space<vmem>>, vector<8x1xf32>
    tpu.vector_store %arg6[%c0_6, %c0_7], %10 {strides = array<i32>} : memref<8x1xf32, #tpu.memory_space<vmem>>, vector<8x1xf32>,
    %c0_i32_8 = arith.constant 0 : i32
    %12 = arith.cmpi eq, %arg1, %c0_i32_8 : i32
    %13 = arith.extui %12 : i1 to i32
    %c0_i32_9 = arith.constant 0 : i32
    %14 = arith.cmpi ne, %13, %c0_i32_9 : i32
    scf.if %14 {
      %c0_10 = arith.constant 0 : index
      %c0_11 = arith.constant 0 : index
      %15 = vector.load %arg6[%c0_10, %c0_11] : memref<8x1xf32, #tpu.memory_space<vmem>>, vector<8x1xf32>
      %c0_12 = arith.constant 0 : index
      %16 = memref.load %arg4[%c0_12] : memref<1xf32, #tpu.memory_space<smem>>
      %17 = vector.broadcast %16 : f32 to vector<8x1xf32>
      %18 = arith.addf %15, %17 : vector<8x1xf32>
      %c0_13 = arith.constant 0 : index
      %c0_14 = arith.constant 0 : index
      %19 = vector.load %arg5[%c0_13, %c0_14] : memref<8x1xf32, #tpu.memory_space<vmem>>, vector<8x1xf32>
      tpu.vector_store %arg5[%c0_13, %c0_14], %18 {strides = array<i32>} : memref<8x1xf32, #tpu.memory_space<vmem>>, vector<8x1xf32>,
    } else {
    }
    return
  }
  func.func @transform_0(%arg0: i32, %arg1: i32) -> (i32, i32) {
    %c0_i32 = arith.constant 0 : i32
    return %arg0, %arg1 : i32, i32
  }
  func.func @transform_1(%arg0: i32, %arg1: i32) -> (i32, i32) {
    %c0_i32 = arith.constant 0 : i32
    %c0_i32_0 = arith.constant 0 : i32
    return %c0_i32, %arg1 : i32, i32
  }
  func.func @transform_2(%arg0: i32, %arg1: i32) -> i32 {
    %c0_i32 = arith.constant 0 : i32
    %c0_i32_0 = arith.constant 0 : i32
    return %c0_i32 : i32
  }
  func.func @transform_3(%arg0: i32, %arg1: i32) -> (i32, i32) {
    %c0_i32 = arith.constant 0 : i32
    %c0_i32_0 = arith.constant 0 : i32
    return %arg0, %c0_i32 : i32, i32
  }
}

</mosaic_0001>

<llo_original>
// kernel: tpu_custom_call.1
$region0: #{tpu_custom_call.1}
  #allocation0 [shape = 'u32[]', space=smem, size = 0x4, offset = 0x4, fixed_abs, tag = 'smem constant byte address 0x4 - core index']
  #allocation1 [shape = 'u32[144,128]{1,0:T(1,128)}', space=vmem, size = 0x12000, scoped, tag = 'internal scratch']
  #allocation2 [shape = 'f32[8,1]{1,0:T(8,128)}', space=vmem, size = 0x1000, scoped, tag = 'scratch operand']
  #allocation3 [shape = 'f32[1]{0:T(128)S(6)}', space=smem, size = 0x200, scoped, tag = 'scoped memory for tpu_custom_call.1']
  %s0 = inlined_call_operand.hbm [shape: f32[8,128], index: 0, kind: input, shape index: {}]
  %s1 = inlined_call_operand.vmem [shape: f32[1,128], index: 1, kind: input, shape index: {}]
  %s2 = inlined_call_operand.<no memory space> [shape: f32[1], index: 2, kind: input, shape index: {}]
  %s3 = inlined_call_operand.vmem [shape: f32[8,1], index: 3, kind: output, shape index: {}]
  %s4 = sld [smem:[#allocation0]]
  $region34: #{tpu_custom_call.1} parent=0
    _
  %s6 = ssub.s32 1, %s4
  %s7 = scalar_select 0, %s6, %s4
  %8 = sst [smem:[#allocation3]] %s2
  $region1: #{tpu_custom_call.1} parent=0
    #allocation4 [shape = 'u8[4096]{0}', space=vmem, size = 0x1000, scoped, tag = 'input window, operand 0, single buffered']
    #allocation5 [shape = 's32[1]{0}', space=sflag, size = 0x4, scoped, tag = 'scoped memory for tpu_custom_call.1']
    %9 = vsyncpa [#allocation5], 0
    // Predicated region
    $region2: #{tpu_custom_call.1} parent=1 // pred_check
      _
    $region3: #{tpu_custom_call.1} parent=1 // pred_check_branch
      %11 = sbr.rel (0) target = $region5
    $region4: #{tpu_custom_call.1} parent=1 // pred_region
      %s13 = ssub.s32 128, 128
      %14 = vsyncadd [#allocation5], %s13
      %s16 = sshll.u32 [#allocation4], 4
      %s17 = int_to_ptr.vmem [resolvable:$true] %s16
      %19 = dma.hbm_to_vmem [thread:$0]  %s0, 128, %s17, [#allocation5]
    $region5: #{tpu_custom_call.1} parent=1 // pred_fallthru
      _
    // Predicated region
    $region6: #{tpu_custom_call.1} parent=1 // pred_check
      _
    $region7: #{tpu_custom_call.1} parent=1 // pred_check_branch
      %21 = sbr.rel (0) target = $region9
    $region8: #{tpu_custom_call.1} parent=1 // pred_region
      _
    $region9: #{tpu_custom_call.1} parent=1 // pred_fallthru
      _
    // Predicated region
    $region10: #{tpu_custom_call.1} parent=1 // pred_check
      _
    $region11: #{tpu_custom_call.1} parent=1 // pred_check_branch
      %23 = sbr.rel (0) target = $region13
    $region12: #{tpu_custom_call.1} parent=1 // pred_region
      _
    $region13: #{tpu_custom_call.1} parent=1 // pred_fallthru
      _
    // Predicated region
    $region14: #{tpu_custom_call.1} parent=1 // pred_check
      _
    $region15: #{tpu_custom_call.1} parent=1 // pred_check_branch
      %25 = sbr.rel (0) target = $region17
    $region16: #{tpu_custom_call.1} parent=1 // pred_region
      %26 = dma.done [#allocation5], 128
    $region17: #{tpu_custom_call.1} parent=1 // pred_fallthru
      _
    %p27 = scmp.eq.s32.totalorder 0, 0
    // Predicated region
    $region18: #{tpu_custom_call.1} parent=1 // pred_check
      %p28 = pneg %p27
    $region19: #{tpu_custom_call.1} parent=1 // pred_check_branch
      %30 = sbr.rel (%p28) target = $region21
    $region20: #{tpu_custom_call.1} parent=1 // pred_region
      %vm31 = vcmask 7168
      %32 = vst.msk [vmem:[#allocation2] sm:$0xff] %vm31, 0.0
    $region21: #{tpu_custom_call.1} parent=1 // pred_fallthru
      _
    %v33 = vld [vmem:[#allocation2] sm:$0xff]
    %v34 = vld [vmem:[#allocation4] sm:$0xff]
    %v35 = vld [vmem:[%s1] sm:$0x1]
    %v37 = vlaneseq
    %v38 = vshrl.u32 %v37, 7
    %v39 = vsub.s32 0, %v38
    %v40 = vrot.slane %v35, %v39
    %v42 = vmul.f32 %v34, %v40
    %43 = vadd.xlane.f32.xlu0 %v42
    %v44 = vpop.xlane.xlu0 %43
    %v45 = vadd.f32 %v33, %v44
    %vm46 = vcmask 7168
    %47 = vst.msk [vmem:[#allocation2] sm:$0xff] %vm46, %v45
    // Predicated region
    $region22: #{tpu_custom_call.1} parent=1 // pred_check
      %p48 = pneg %p27
    $region23: #{tpu_custom_call.1} parent=1 // pred_check_branch
      %50 = sbr.rel (%p48) target = $region25
    $region24: #{tpu_custom_call.1} parent=1 // pred_region
      %v51 = vld [vmem:[#allocation2] sm:$0xff]
      %s52 = sld [smem:[#allocation3]]
      %v53 = vstv %s52
      %v54 = vadd.f32 %v51, %v53
      %55 = vst.msk [vmem:[%s3] sm:$0xff] %vm46, %v54
    $region25: #{tpu_custom_call.1} parent=1 // pred_fallthru
      _
    // Predicated region
    $region26: #{tpu_custom_call.1} parent=1 // pred_check
      _
    $region27: #{tpu_custom_call.1} parent=1 // pred_check_branch
      %57 = sbr.rel (0) target = $region29
    $region28: #{tpu_custom_call.1} parent=1 // pred_region
      _
    $region29: #{tpu_custom_call.1} parent=1 // pred_fallthru
      _
    // Predicated region
    $region30: #{tpu_custom_call.1} parent=1 // pred_check
      _
    $region31: #{tpu_custom_call.1} parent=1 // pred_check_branch
      %59 = sbr.rel (0) target = $region33
    $region32: #{tpu_custom_call.1} parent=1 // pred_region
      _
    $region33: #{tpu_custom_call.1} parent=1 // pred_fallthru
      _
    %60 = vsyncpa [#allocation5], 1

</llo_original>
